<compile_context>
chip_gen: v7x
topology: tpu7x:2x2x1
jax: 0.10.0
libtpu: 0.0.40
codegen_flags: <defaults>
</compile_context>

<pallas_src>
import functools

import jax
import jax.numpy as jnp
from jax.experimental import pallas as pl
from jax.experimental.pallas import tpu as pltpu


def _round_up(x, m):
    return ((x + m - 1) // m) * m


def _pad2(a, rows, cols, dtype=None):
    out = jnp.pad(a, ((0, rows - a.shape[0]), (0, cols - a.shape[1])))
    return out.astype(dtype) if dtype is not None else out


def _vmem_capacity_bytes():
    try:
        return int(pltpu.get_tpu_info().vmem_capacity_bytes)
    except Exception:
        return 64 << 20  # conservative fallback (v7x per-TC VMEM)


# ----------------------------------------------------------------------------
# Kernel 1: RESIDENT variant.  grid = (batch_tiles,), all weights in VMEM,
# hidden stack unrolled (static Python loop -> full LLO scheduling visibility).
# ----------------------------------------------------------------------------
def _mlp_resident_kernel(n_hidden, *refs):
    if n_hidden > 0:
        x_ref, w0_ref, b0_ref, wh_ref, bh_ref, wf_ref, bf_ref, o_ref = refs
    else:
        x_ref, w0_ref, b0_ref, wf_ref, bf_ref, o_ref = refs
        wh_ref = bh_ref = None

    # First Linear (bf16 MXU, f32 accumulation) + bias + ReLU in f32.
    h = jnp.dot(x_ref[...], w0_ref[...], preferred_element_type=jnp.float32)
    h = jnp.maximum(h + b0_ref[...], 0.0)
    # Hidden Linears (no activation, matching the PyTorch Sequential).
    for layer in range(n_hidden):
        h = jnp.dot(h.astype(jnp.bfloat16), wh_ref[layer],
                    preferred_element_type=jnp.float32) + bh_ref[layer]
    # Final Linear + sigmoid.
    y = jnp.dot(h.astype(jnp.bfloat16), wf_ref[...],
                preferred_element_type=jnp.float32) + bf_ref[...]
    o_ref[...] = jax.nn.sigmoid(y)


def _resident_forward(xpad, w0, b0, wh, bh, wf, bf, *, n_hidden, tb, vmem_limit):
    b_pad, fin_pad = xpad.shape
    w_pad = w0.shape[1]
    t_pad = wf.shape[1]
    n_bt = b_pad // tb

    in_specs = [
        pl.BlockSpec((tb, fin_pad), lambda b: (b, 0)),
        pl.BlockSpec((fin_pad, w_pad), lambda b: (0, 0)),
        pl.BlockSpec((1, w_pad), lambda b: (0, 0)),
    ]
    args = [xpad, w0, b0]
    if n_hidden > 0:
        in_specs += [
            pl.BlockSpec((n_hidden, w_pad, w_pad), lambda b: (0, 0, 0)),
            pl.BlockSpec((n_hidden, 1, w_pad), lambda b: (0, 0, 0)),
        ]
        args += [wh, bh]
    in_specs += [
        pl.BlockSpec((w_pad, t_pad), lambda b: (0, 0)),
        pl.BlockSpec((1, t_pad), lambda b: (0, 0)),
    ]
    args += [wf, bf]

    return pl.pallas_call(
        functools.partial(_mlp_resident_kernel, n_hidden),
        out_shape=jax.ShapeDtypeStruct((b_pad, t_pad), jnp.float32),
        grid=(n_bt,),
        in_specs=in_specs,
        out_specs=pl.BlockSpec((tb, t_pad), lambda b: (b, 0)),
        compiler_params=pltpu.CompilerParams(
            dimension_semantics=("parallel",),
            vmem_limit_bytes=vmem_limit),
    )(*args)


# ----------------------------------------------------------------------------
# Kernel 2: STREAMING variant.  grid = (batch_tiles, nk + n_hidden):
#   phases [0, nk)       : K-tiled first Linear accumulated into f32 scratch,
#                          bias+ReLU fused into the last K step.
#   phases [nk, nk+n_h)  : one hidden Linear per phase (weights streamed).
#   last phase           : final Linear + sigmoid -> output block.
# ----------------------------------------------------------------------------
def _mlp_stream_kernel(nk, n_hidden, x_ref, w0_ref, b0_ref, wh_ref, bh_ref,
                       wf_ref, bf_ref, o_ref, h_ref):
    p = pl.program_id(1)
    last_k = nk - 1

    @pl.when(p < nk)
    def _():
        prev = jnp.where(p == 0, 0.0, h_ref[...])          # init on first K step
        acc = prev + jnp.dot(x_ref[...], w0_ref[...],
                             preferred_element_type=jnp.float32)
        # Fuse bias + ReLU into the last K step (no extra scratch round-trip).
        acc = jnp.where(p == last_k, jnp.maximum(acc + b0_ref[...], 0.0), acc)
        h_ref[...] = acc

    if n_hidden > 0:
        @pl.when(p >= nk)
        def _():
            h_ref[...] = (
                jnp.dot(h_ref[...].astype(jnp.bfloat16), wh_ref[0],
                        preferred_element_type=jnp.float32) + bh_ref[0])

    @pl.when(p == nk + n_hidden - 1)
    def _():
        y = jnp.dot(h_ref[...].astype(jnp.bfloat16), wf_ref[...],
                    preferred_element_type=jnp.float32) + bf_ref[...]
        o_ref[...] = jax.nn.sigmoid(y)


def _stream_forward(xpad, w0, b0, wh, bh, wf, bf, *, n_hidden, tb, tk,
                    vmem_limit):
    b_pad, fin_pad = xpad.shape
    w_pad = w0.shape[1]
    t_pad = wf.shape[1]
    n_bt = b_pad // tb
    nk = fin_pad // tk
    n_wh = wh.shape[0]
    phases = nk + n_hidden
    last_k = nk - 1

    # Index maps clamp to the last valid block so, once a phase group is done,
    # the block index stays constant and Pallas stops re-fetching it.
    in_specs = [
        pl.BlockSpec((tb, tk), lambda b, p: (b, jnp.minimum(p, last_k))),
        pl.BlockSpec((tk, w_pad), lambda b, p: (jnp.minimum(p, last_k), 0)),
        pl.BlockSpec((1, w_pad), lambda b, p: (0, 0)),
        pl.BlockSpec((1, w_pad, w_pad),
                     lambda b, p: (jnp.clip(p - nk, 0, n_wh - 1), 0, 0)),
        pl.BlockSpec((1, 1, w_pad),
                     lambda b, p: (jnp.clip(p - nk, 0, n_wh - 1), 0, 0)),
        pl.BlockSpec((w_pad, t_pad), lambda b, p: (0, 0)),
        pl.BlockSpec((1, t_pad), lambda b, p: (0, 0)),
    ]

    return pl.pallas_call(
        functools.partial(_mlp_stream_kernel, nk, n_hidden),
        out_shape=jax.ShapeDtypeStruct((b_pad, t_pad), jnp.float32),
        grid=(n_bt, phases),
        in_specs=in_specs,
        out_specs=pl.BlockSpec((tb, t_pad), lambda b, p: (b, 0)),
        scratch_shapes=[pltpu.VMEM((tb, w_pad), jnp.float32)],
        compiler_params=pltpu.CompilerParams(
            dimension_semantics=("parallel", "arbitrary"),
            vmem_limit_bytes=vmem_limit),
    )(xpad, w0, b0, wh, bh, wf, bf)


# ----------------------------------------------------------------------------
# jit-fused forward: reshape + pad + bf16 cast + pallas_call + slice in one jit
# (the pad is fused with the kernel dispatch instead of a separate HBM pass).
# ----------------------------------------------------------------------------
@functools.partial(
    jax.jit,
    static_argnames=("n_time_bins", "n_hidden", "use_stream", "b_pad", "tb",
                     "tk", "vmem_limit"))
def _forward_impl(xflat, w0, b0, wh, bh, wf, bf, *, n_time_bins, n_hidden,
                  use_stream, b_pad, tb, tk, vmem_limit):
    batch, fin = xflat.shape
    fin_pad, w_pad = w0.shape
    xpad = jnp.pad(xflat, ((0, b_pad - batch), (0, fin_pad - fin)))
    xpad = xpad.astype(jnp.bfloat16)
    if use_stream:
        if wh is None:   # n_hidden == 0: tiny dummy block, never applied
            wh = jnp.zeros((1, w_pad, w_pad), jnp.bfloat16)
            bh = jnp.zeros((1, 1, w_pad), jnp.float32)
        out = _stream_forward(xpad, w0, b0, wh, bh, wf, bf, n_hidden=n_hidden,
                              tb=tb, tk=tk, vmem_limit=vmem_limit)
    else:
        out = _resident_forward(xpad, w0, b0, wh, bh, wf, bf, n_hidden=n_hidden,
                                tb=tb, vmem_limit=vmem_limit)
    return out[:batch, :n_time_bins]


# ----------------------------------------------------------------------------
# Model wrapper (parameter init + U-fold + bf16 padding = JAX glue at init)
# ----------------------------------------------------------------------------
class NeuralNetworkClassificationModel:
    def __init__(self, n_recordings, n_neurons_per_recording, n_time_bins,
                 width, hidden_layers, rank, key):
        self.n_recordings = n_recordings
        self.n_neurons_per_recording = list(n_neurons_per_recording)
        self.n_time_bins = n_time_bins
        self.width = width
        self.hidden_layers = hidden_layers
        self.rank = rank
        self.n_hidden = hidden_layers - 1

        n_linear = 1 + self.n_hidden + 1
        keys = jax.random.split(key, n_recordings + n_linear)
        u_keys, lin_keys = keys[:n_recordings], keys[n_recordings:]

        # Us[i] ~ randn(n_neurons_i, rank), as in the PyTorch module.
        self.Us = [jax.random.normal(u_keys[i], (n, rank), jnp.float32)
                   for i, n in enumerate(self.n_neurons_per_recording)]

        def linear_init(k, fan_in, fan_out):
            kw, kb = jax.random.split(k)
            lim = 1.0 / float(fan_in) ** 0.5
            w = jax.random.uniform(kw, (fan_in, fan_out), jnp.float32, -lim, lim)
            b = jax.random.uniform(kb, (fan_out,), jnp.float32, -lim, lim)
            return w, b

        ki = iter(lin_keys)
        self.w0, self.b0 = linear_init(next(ki), rank * n_time_bins, width)
        self.wh_list, self.bh_list = [], []
        for _ in range(self.n_hidden):
            w, b = linear_init(next(ki), width, width)
            self.wh_list.append(w)
            self.bh_list.append(b)
        self.wf, self.bf = linear_init(next(ki), width, n_time_bins)

        # ---- folded + lane-padded bf16 parameters for the kernels ----
        self.w_pad = _round_up(width, 128)
        self.t_pad = _round_up(n_time_bins, 128)

        self.fin_pads, self.k_tiles, self.w0_eff_pad = [], [], []
        w0_rt = self.w0.reshape(rank, n_time_bins, width)
        for U in self.Us:
            n = U.shape[0]
            fin = n * n_time_bins
            tk = min(2048, _round_up(fin, 128))      # K tile for the streamed path
            fin_pad = _round_up(fin, tk)
            # W0_eff[n*T + t, w] = sum_r U[n, r] * w0[r*T + t, w]  (exact in f32)
            w0_eff = jnp.einsum('nr,rtw->ntw', U, w0_rt,
                                precision=jax.lax.Precision.HIGHEST)
            w0_eff = w0_eff.reshape(fin, width)
            self.fin_pads.append(fin_pad)
            self.k_tiles.append(tk)
            self.w0_eff_pad.append(_pad2(w0_eff, fin_pad, self.w_pad, jnp.bfloat16))

        self.b0_pad = _pad2(self.b0[None, :], 1, self.w_pad)            # f32
        if self.n_hidden > 0:
            self.wh_pad = jnp.stack([_pad2(w, self.w_pad, self.w_pad, jnp.bfloat16)
                                     for w in self.wh_list])
            self.bh_pad = jnp.stack([_pad2(b[None, :], 1, self.w_pad)
                                     for b in self.bh_list])             # f32
        else:
            self.wh_pad = self.bh_pad = None
        self.wf_pad = _pad2(self.wf, self.w_pad, self.t_pad, jnp.bfloat16)
        self.bf_pad = _pad2(self.bf[None, :], 1, self.t_pad)            # f32

    def __call__(self, recording_index, recording_X, force_stream=False):
        # recording_index selects differently-shaped parameters -> Python-level
        # selection, exactly as in the PyTorch module.
        batch, n, t = recording_X.shape
        fin = n * t
        xflat = recording_X.reshape(batch, fin)

        # Batch tiling: multiple of 16 (bf16 sublanes); >128 rows -> 128-row
        # tiles so the "parallel" axis can split across TensorCores (v7x).
        b16 = _round_up(batch, 16)
        if b16 <= 128:
            tb, b_pad = b16, b16
        else:
            tb, b_pad = 128, _round_up(batch, 128)

        fin_pad = self.fin_pads[recording_index]
        w_pad, t_pad, nh = self.w_pad, self.t_pad, self.n_hidden
        BF16_B, F32_B = 2, 4

        # ---- VMEM budgeting / kernel-variant dispatch ----
        cap = _vmem_capacity_bytes()
        resident_need = (
            2 * BF16_B * (tb * fin_pad + fin_pad * w_pad
                          + nh * w_pad * w_pad + w_pad * t_pad)
            + 2 * F32_B * ((1 + nh) * w_pad + t_pad)
            + 2 * F32_B * tb * t_pad
            + 4 * F32_B * tb * w_pad)
        use_stream = bool(force_stream) or resident_need > int(0.7 * cap)

        if use_stream:
            tk = self.k_tiles[recording_index]
            need = (
                2 * BF16_B * (tb * tk + tk * w_pad + w_pad * w_pad + w_pad * t_pad)
                + 2 * F32_B * (2 * w_pad + t_pad)
                + 2 * F32_B * tb * t_pad
                + 3 * F32_B * tb * w_pad)
        else:
            tk = fin_pad
            need = resident_need

        vmem_limit = int(min(max(2 * need + (8 << 20), 32 << 20),
                             cap - (8 << 20)))

        return _forward_impl(
            xflat, self.w0_eff_pad[recording_index], self.b0_pad,
            self.wh_pad, self.bh_pad, self.wf_pad, self.bf_pad,
            n_time_bins=self.n_time_bins, n_hidden=nh, use_stream=use_stream,
            b_pad=b_pad, tb=tb, tk=tk, vmem_limit=vmem_limit)


# ----------------------------------------------------------------------------
# References
# ----------------------------------------------------------------------------
def reference_f32(model, recording_index, recording_X):
    """Original (un-folded, un-padded, f32) module semantics."""
    u = model.Us[recording_index]
    p = jnp.einsum('nr,bnt->brt', u, recording_X)          # Us[i].T @ recording_X
    h = p.reshape(recording_X.shape[0], -1)                 # torch.flatten(X, 1)
    h = jnp.maximum(h @ model.w0 + model.b0, 0.0)
    for layer in range(model.n_hidden):
        h = h @ model.wh_list[layer] + model.bh_list[layer]
    y = h @ model.wf + model.bf
    return jax.nn.sigmoid(y)


def reference_bf16(model, recording_index, recording_X):
    """Mimics kernel numerics: folded U, bf16 operands, f32 accumulation."""
    batch, n, t = recording_X.shape
    fin, width = n * t, model.width
    q = lambda a: a.astype(jnp.bfloat16).astype(jnp.float32)
    x = q(recording_X.reshape(batch, fin))
    w0 = model.w0_eff_pad[recording_index][:fin, :width].astype(jnp.float32)
    h = jnp.maximum(x @ w0 + model.b0, 0.0)
    for layer in range(model.n_hidden):
        wh = model.wh_pad[layer, :width, :width].astype(jnp.float32)
        h = q(h) @ wh + model.bh_list[layer]
    wf = model.wf_pad[:width, :model.n_time_bins].astype(jnp.float32)
    y = q(h) @ wf + model.bf
    return jax.nn.sigmoid(y)


if __name__ == "__main__":
    key = jax.random.PRNGKey(0)
    k_model, k_model1, k_x0, k_x1 = jax.random.split(key, 4)

    n_recordings = 2
    n_neurons_per_recording = [12, 16]
    n_time_bins = 8
    width = 32
    hidden_layers = 3
    rank = 4
    batch = 2

    model = NeuralNetworkClassificationModel(
        n_recordings, n_neurons_per_recording, n_time_bins,
        width, hidden_layers, rank, k_model)

    # Resident (single-step, unrolled) variant on both recordings.
    for rec_idx, kx in ((1, k_x1), (0, k_x0)):
        x = jax.random.normal(
            kx, (batch, n_neurons_per_recording[rec_idx], n_time_bins),
            jnp.float32)
        out = jax.block_until_ready(model(rec_idx, x))
        assert out.shape == (batch, n_time_bins)
        assert jnp.allclose(out, reference_bf16(model, rec_idx, x),
                            atol=1e-3, rtol=1e-3)
        assert jnp.allclose(out, reference_f32(model, rec_idx, x),
                            atol=2e-2, rtol=2e-2)

    # Streaming (K-tiled first layer + per-layer weight streaming) variant,
    # forced on the small model to exercise that code path as well.
    xs = jax.random.normal(
        k_x0, (batch, n_neurons_per_recording[0], n_time_bins), jnp.float32)
    out_s = jax.block_until_ready(model(0, xs, force_stream=True))
    assert out_s.shape == (batch, n_time_bins)
    assert jnp.allclose(out_s, reference_bf16(model, 0, xs), atol=1e-3, rtol=1e-3)
    assert jnp.allclose(out_s, reference_f32(model, 0, xs), atol=2e-2, rtol=2e-2)

    # hidden_layers == 1 path (no hidden Linear blocks at all).
    model1 = NeuralNetworkClassificationModel(
        n_recordings, n_neurons_per_recording, n_time_bins,
        width, 1, rank, k_model1)
    out1 = jax.block_until_ready(model1(0, xs))
    assert out1.shape == (batch, n_time_bins)
    assert jnp.allclose(out1, reference_bf16(model1, 0, xs), atol=1e-3, rtol=1e-3)
    assert jnp.allclose(out1, reference_f32(model1, 0, xs), atol=2e-2, rtol=2e-2)

    print("KERNEL_OK")
</pallas_src>

<mosaic_0001>
module attributes {stable_mosaic.version = 11 : i64} {
  func.func @_mlp_resident_kernel(%arg0: i32, %arg1: memref<16x128xbf16, #tpu.memory_space<vmem>>, %arg2: memref<128x128xbf16, #tpu.memory_space<vmem>>, %arg3: memref<1x128xf32, #tpu.memory_space<vmem>>, %arg4: memref<2x128x128xbf16, #tpu.memory_space<vmem>>, %arg5: memref<2x1x128xf32, #tpu.memory_space<vmem>>, %arg6: memref<128x128xbf16, #tpu.memory_space<vmem>>, %arg7: memref<1x128xf32, #tpu.memory_space<vmem>>, %arg8: memref<16x128xf32, #tpu.memory_space<vmem>>) attributes {dimension_semantics = [#tpu.dimension_semantics<parallel>], iteration_bounds = array<i64: 1>, scalar_prefetch = 0 : i64, scratch_operands = 0 : i64, tpu.core_type = #tpu.core_type<tc>, window_params = [{transform_indices = @transform_0, window_bounds = array<i64: 16, 128>}, {pipeline_mode = #tpu.pipeline_mode<synchronous>, transform_indices = @transform_1, window_bounds = array<i64: 128, 128>}, {pipeline_mode = #tpu.pipeline_mode<synchronous>, transform_indices = @transform_2, window_bounds = array<i64: 1, 128>}, {pipeline_mode = #tpu.pipeline_mode<synchronous>, transform_indices = @transform_3, window_bounds = array<i64: 2, 128, 128>}, {pipeline_mode = #tpu.pipeline_mode<synchronous>, transform_indices = @transform_4, window_bounds = array<i64: 2, 1, 128>}, {pipeline_mode = #tpu.pipeline_mode<synchronous>, transform_indices = @transform_5, window_bounds = array<i64: 128, 128>}, {pipeline_mode = #tpu.pipeline_mode<synchronous>, transform_indices = @transform_6, window_bounds = array<i64: 1, 128>}, {transform_indices = @transform_7, window_bounds = array<i64: 16, 128>}]} {
    %c0 = arith.constant 0 : index
    %c0_0 = arith.constant 0 : index
    %0 = vector.load %arg1[%c0, %c0_0] : memref<16x128xbf16, #tpu.memory_space<vmem>>, vector<16x128xbf16>
    %c0_1 = arith.constant 0 : index
    %c0_2 = arith.constant 0 : index
    %1 = vector.load %arg2[%c0_1, %c0_2] : memref<128x128xbf16, #tpu.memory_space<vmem>>, vector<128x128xbf16>
    %cst = arith.constant dense<0.000000e+00> : vector<16x128xf32>
    %2 = tpu.matmul %0, %1, %cst {dimension_numbers = #tpu.dot_dimension_numbers<[1], [0], [0], [1], [0, 0, 1, 1], [], []>} : vector<16x128xbf16>, vector<128x128xbf16>, vector<16x128xf32> -> vector<16x128xf32>
    %c0_3 = arith.constant 0 : index
    %c0_4 = arith.constant 0 : index
    %3 = vector.load %arg3[%c0_3, %c0_4] : memref<1x128xf32, #tpu.memory_space<vmem>>, vector<1x128xf32>
    %4 = vector.broadcast %3 : vector<1x128xf32> to vector<16x128xf32>
    %5 = arith.addf %2, %4 : vector<16x128xf32>
    %cst_5 = arith.constant 0.000000e+00 : f32
    %6 = vector.broadcast %cst_5 : f32 to vector<16x128xf32>
    %7 = arith.maximumf %5, %6 : vector<16x128xf32>
    %8 = arith.truncf %7 : vector<16x128xf32> to vector<16x128xbf16>
    %c0_6 = arith.constant 0 : index
    %c0_7 = arith.constant 0 : index
    %c0_8 = arith.constant 0 : index
    %9 = vector.load %arg4[%c0_6, %c0_7, %c0_8] : memref<2x128x128xbf16, #tpu.memory_space<vmem>>, vector<1x128x128xbf16>
    %10 = vector.shape_cast %9 : vector<1x128x128xbf16> to vector<128x128xbf16>
    %cst_9 = arith.constant dense<0.000000e+00> : vector<16x128xf32>
    %11 = tpu.matmul %8, %10, %cst_9 {dimension_numbers = #tpu.dot_dimension_numbers<[1], [0], [0], [1], [0, 0, 1, 1], [], []>} : vector<16x128xbf16>, vector<128x128xbf16>, vector<16x128xf32> -> vector<16x128xf32>
    %c0_10 = arith.constant 0 : index
    %c0_11 = arith.constant 0 : index
    %c0_12 = arith.constant 0 : index
    %12 = vector.load %arg5[%c0_10, %c0_11, %c0_12] : memref<2x1x128xf32, #tpu.memory_space<vmem>>, vector<1x1x128xf32>
    %13 = vector.shape_cast %12 : vector<1x1x128xf32> to vector<1x128xf32>
    %14 = vector.broadcast %13 : vector<1x128xf32> to vector<16x128xf32>
    %15 = arith.addf %11, %14 : vector<16x128xf32>
    %16 = arith.truncf %15 : vector<16x128xf32> to vector<16x128xbf16>
    %c1 = arith.constant 1 : index
    %c0_13 = arith.constant 0 : index
    %c0_14 = arith.constant 0 : index
    %17 = vector.load %arg4[%c1, %c0_13, %c0_14] : memref<2x128x128xbf16, #tpu.memory_space<vmem>>, vector<1x128x128xbf16>
    %18 = vector.shape_cast %17 : vector<1x128x128xbf16> to vector<128x128xbf16>
    %cst_15 = arith.constant dense<0.000000e+00> : vector<16x128xf32>
    %19 = tpu.matmul %16, %18, %cst_15 {dimension_numbers = #tpu.dot_dimension_numbers<[1], [0], [0], [1], [0, 0, 1, 1], [], []>} : vector<16x128xbf16>, vector<128x128xbf16>, vector<16x128xf32> -> vector<16x128xf32>
    %c1_16 = arith.constant 1 : index
    %c0_17 = arith.constant 0 : index
    %c0_18 = arith.constant 0 : index
    %20 = vector.load %arg5[%c1_16, %c0_17, %c0_18] : memref<2x1x128xf32, #tpu.memory_space<vmem>>, vector<1x1x128xf32>
    %21 = vector.shape_cast %20 : vector<1x1x128xf32> to vector<1x128xf32>
    %22 = vector.broadcast %21 : vector<1x128xf32> to vector<16x128xf32>
    %23 = arith.addf %19, %22 : vector<16x128xf32>
    %24 = arith.truncf %23 : vector<16x128xf32> to vector<16x128xbf16>
    %c0_19 = arith.constant 0 : index
    %c0_20 = arith.constant 0 : index
    %25 = vector.load %arg6[%c0_19, %c0_20] : memref<128x128xbf16, #tpu.memory_space<vmem>>, vector<128x128xbf16>
    %cst_21 = arith.constant dense<0.000000e+00> : vector<16x128xf32>
    %26 = tpu.matmul %24, %25, %cst_21 {dimension_numbers = #tpu.dot_dimension_numbers<[1], [0], [0], [1], [0, 0, 1, 1], [], []>} : vector<16x128xbf16>, vector<128x128xbf16>, vector<16x128xf32> -> vector<16x128xf32>
    %c0_22 = arith.constant 0 : index
    %c0_23 = arith.constant 0 : index
    %27 = vector.load %arg7[%c0_22, %c0_23] : memref<1x128xf32, #tpu.memory_space<vmem>>, vector<1x128xf32>
    %28 = vector.broadcast %27 : vector<1x128xf32> to vector<16x128xf32>
    %29 = arith.addf %26, %28 : vector<16x128xf32>
    %30 = arith.negf %29 : vector<16x128xf32>
    %31 = math.exp %30 : vector<16x128xf32>
    %cst_24 = arith.constant 1.000000e+00 : f32
    %32 = vector.broadcast %cst_24 : f32 to vector<16x128xf32>
    %33 = arith.addf %32, %31 : vector<16x128xf32>
    %34 = arith.divf %32, %33 : vector<16x128xf32>
    %c0_25 = arith.constant 0 : index
    %c0_26 = arith.constant 0 : index
    %35 = vector.load %arg8[%c0_25, %c0_26] : memref<16x128xf32, #tpu.memory_space<vmem>>, vector<16x128xf32>
    tpu.vector_store %arg8[%c0_25, %c0_26], %34 {strides = array<i32>} : memref<16x128xf32, #tpu.memory_space<vmem>>, vector<16x128xf32>,
    return
  }
  func.func @transform_0(%arg0: i32) -> (i32, i32) {
    %c0_i32 = arith.constant 0 : i32
    %c0_i32_0 = arith.constant 0 : i32
    return %arg0, %c0_i32 : i32, i32
  }
  func.func @transform_1(%arg0: i32) -> (i32, i32) {
    %c0_i32 = arith.constant 0 : i32
    %c0_i32_0 = arith.constant 0 : i32
    %c0_i32_1 = arith.constant 0 : i32
    return %c0_i32, %c0_i32_0 : i32, i32
  }
  func.func @transform_2(%arg0: i32) -> (i32, i32) {
    %c0_i32 = arith.constant 0 : i32
    %c0_i32_0 = arith.constant 0 : i32
    %c0_i32_1 = arith.constant 0 : i32
    return %c0_i32, %c0_i32_0 : i32, i32
  }
  func.func @transform_3(%arg0: i32) -> (i32, i32, i32) {
    %c0_i32 = arith.constant 0 : i32
    %c0_i32_0 = arith.constant 0 : i32
    %c0_i32_1 = arith.constant 0 : i32
    %c0_i32_2 = arith.constant 0 : i32
    return %c0_i32, %c0_i32_0, %c0_i32_1 : i32, i32, i32
  }
  func.func @transform_4(%arg0: i32) -> (i32, i32, i32) {
    %c0_i32 = arith.constant 0 : i32
    %c0_i32_0 = arith.constant 0 : i32
    %c0_i32_1 = arith.constant 0 : i32
    %c0_i32_2 = arith.constant 0 : i32
    return %c0_i32, %c0_i32_0, %c0_i32_1 : i32, i32, i32
  }
  func.func @transform_5(%arg0: i32) -> (i32, i32) {
    %c0_i32 = arith.constant 0 : i32
    %c0_i32_0 = arith.constant 0 : i32
    %c0_i32_1 = arith.constant 0 : i32
    return %c0_i32, %c0_i32_0 : i32, i32
  }
  func.func @transform_6(%arg0: i32) -> (i32, i32) {
    %c0_i32 = arith.constant 0 : i32
    %c0_i32_0 = arith.constant 0 : i32
    %c0_i32_1 = arith.constant 0 : i32
    return %c0_i32, %c0_i32_0 : i32, i32
  }
  func.func @transform_7(%arg0: i32) -> (i32, i32) {
    %c0_i32 = arith.constant 0 : i32
    %c0_i32_0 = arith.constant 0 : i32
    return %arg0, %c0_i32 : i32, i32
  }
}

</mosaic_0001>

<llo_original>
// kernel: _forward_impl.1
$region0: #{_forward_impl.1}
  #allocation0 [shape = 'u32[]', space=smem, size = 0x4, offset = 0x4, fixed_abs, tag = 'smem constant byte address 0x4 - core index']
  #allocation1 [shape = 'u32[144,128]{1,0:T(1,128)}', space=vmem, size = 0x12000, scoped, tag = 'internal scratch']
  %s0 = inlined_call_operand.vmem [shape: bf16[16,128], index: 0, kind: input, shape index: {}]
  %s1 = inlined_call_operand.hbm [shape: bf16[128,128], index: 1, kind: input, shape index: {}]
  %s2 = inlined_call_operand.vmem [shape: f32[1,128], index: 2, kind: input, shape index: {}]
  %s3 = inlined_call_operand.hbm [shape: bf16[2,128,128], index: 3, kind: input, shape index: {}]
  %s4 = inlined_call_operand.vmem [shape: f32[2,1,128], index: 4, kind: input, shape index: {}]
  %s5 = inlined_call_operand.hbm [shape: bf16[128,128], index: 5, kind: input, shape index: {}]
  %s6 = inlined_call_operand.vmem [shape: f32[1,128], index: 6, kind: input, shape index: {}]
  %s7 = inlined_call_operand.vmem [shape: f32[16,128], index: 7, kind: output, shape index: {}]
  %s8 = sld [smem:[#allocation0]]
  $region50: #{_forward_impl.1} parent=0
    _
  %s10 = ssub.s32 1, %s8
  %s11 = scalar_select 0, %s10, %s8
  $region1: #{_forward_impl.1} parent=0
    #allocation2 [shape = 'u8[32768]{0}', space=vmem, size = 0x8000, scoped, tag = 'input window, operand 1, single buffered']
    #allocation3 [shape = 's32[1]{0}', space=sflag, size = 0x4, scoped, tag = 'scoped memory for _forward_impl.1']
    #allocation4 [shape = 'u8[65536]{0}', space=vmem, size = 0x10000, scoped, tag = 'input window, operand 3, single buffered']
    #allocation5 [shape = 's32[1]{0}', space=sflag, size = 0x4, scoped, tag = 'scoped memory for _forward_impl.1']
    #allocation6 [shape = 'u8[32768]{0}', space=vmem, size = 0x8000, scoped, tag = 'input window, operand 5, single buffered']
    %12 = vsyncpa [#allocation3], 0
    %13 = vsyncpa [#allocation5], 0
    // Predicated region
    $region2: #{_forward_impl.1} parent=1 // pred_check
      _
    $region3: #{_forward_impl.1} parent=1 // pred_check_branch
      %15 = sbr.rel (0) target = $region5
    $region4: #{_forward_impl.1} parent=1 // pred_region
      _
    $region5: #{_forward_impl.1} parent=1 // pred_fallthru
      _
    // Predicated region
    $region6: #{_forward_impl.1} parent=1 // pred_check
      _
    $region7: #{_forward_impl.1} parent=1 // pred_check_branch
      %17 = sbr.rel (0) target = $region9
    $region8: #{_forward_impl.1} parent=1 // pred_region
      %s19 = ssub.s32 1024, 1024
      %20 = vsyncadd [#allocation3], %s19
      %s21 = sshll.u32 [#allocation2], 4
      %s22 = int_to_ptr.vmem [resolvable:$true] %s21
      %27 = dma.hbm_to_vmem [thread:$0]  %s1, 1024, %s22, [#allocation3], 64, 64, 4
    $region9: #{_forward_impl.1} parent=1 // pred_fallthru
      _
    // Predicated region
    $region10: #{_forward_impl.1} parent=1 // pred_check
      _
    $region11: #{_forward_impl.1} parent=1 // pred_check_branch
      %29 = sbr.rel (0) target = $region13
    $region12: #{_forward_impl.1} parent=1 // pred_region
      _
    $region13: #{_forward_impl.1} parent=1 // pred_fallthru
      _
    // Predicated region
    $region14: #{_forward_impl.1} parent=1 // pred_check
      _
    $region15: #{_forward_impl.1} parent=1 // pred_check_branch
      %31 = sbr.rel (0) target = $region17
    $region16: #{_forward_impl.1} parent=1 // pred_region
      %s33 = ssub.s32 2048, 2048
      %34 = vsyncadd [#allocation5], %s33
      %s35 = sshll.u32 [#allocation4], 4
      %s36 = int_to_ptr.vmem [resolvable:$true] %s35
      %41 = dma.hbm_to_vmem [thread:$0]  %s3, 2048, %s36, [#allocation5], 64, 64, 4
    $region17: #{_forward_impl.1} parent=1 // pred_fallthru
      _
    // Predicated region
    $region18: #{_forward_impl.1} parent=1 // pred_check
      _
    $region19: #{_forward_impl.1} parent=1 // pred_check_branch
      %43 = sbr.rel (0) target = $region21
    $region20: #{_forward_impl.1} parent=1 // pred_region
      _
    $region21: #{_forward_impl.1} parent=1 // pred_fallthru
      _
    // Predicated region
    $region22: #{_forward_impl.1} parent=1 // pred_check
      _
    $region23: #{_forward_impl.1} parent=1 // pred_check_branch
      %45 = sbr.rel (0) target = $region25
    $region24: #{_forward_impl.1} parent=1 // pred_region
      %s47 = ssub.s32 1024, 1024
      %48 = vsyncadd [#allocation5], %s47
      %s49 = sshll.u32 [#allocation6], 4
      %s50 = int_to_ptr.vmem [resolvable:$true] %s49
      %55 = dma.hbm_to_vmem [thread:$0]  %s5, 1024, %s50, [#allocation5], 64, 64, 4
    $region25: #{_forward_impl.1} parent=1 // pred_fallthru
      _
    // Predicated region
    $region26: #{_forward_impl.1} parent=1 // pred_check
      _
    $region27: #{_forward_impl.1} parent=1 // pred_check_branch
      %57 = sbr.rel (0) target = $region29
    $region28: #{_forward_impl.1} parent=1 // pred_region
      _
    $region29: #{_forward_impl.1} parent=1 // pred_fallthru
      _
    // Predicated region
    $region30: #{_forward_impl.1} parent=1 // pred_check
      _
    $region31: #{_forward_impl.1} parent=1 // pred_check_branch
      %59 = sbr.rel (0) target = $region33
    $region32: #{_forward_impl.1} parent=1 // pred_region
      %60 = dma.done [#allocation3], 1024
    $region33: #{_forward_impl.1} parent=1 // pred_fallthru
      _
    // Predicated region
    $region34: #{_forward_impl.1} parent=1 // pred_check
      _
    $region35: #{_forward_impl.1} parent=1 // pred_check_branch
      %62 = sbr.rel (0) target = $region37
    $region36: #{_forward_impl.1} parent=1 // pred_region
      %63 = dma.done [#allocation5], 2048
    $region37: #{_forward_impl.1} parent=1 // pred_fallthru
      _
    // Predicated region
    $region38: #{_forward_impl.1} parent=1 // pred_check
      _
    $region39: #{_forward_impl.1} parent=1 // pred_check_branch
      %65 = sbr.rel (0) target = $region41
    $region40: #{_forward_impl.1} parent=1 // pred_region
      %66 = dma.done [#allocation5], 1024
    $region41: #{_forward_impl.1} parent=1 // pred_fallthru
      _
    %v68 = vld [vmem:[%s0] sm:$0xf]
    %v69 = vld [vmem:[%s0 + $0x4] sm:$0xf]
    %v70 = vld [vmem:[#allocation2] sm:$0xf]
    %v71 = vld [vmem:[#allocation2 + $0x4] sm:$0xf]
    %v72 = vld [vmem:[#allocation2 + $0x8] sm:$0xf]
    %v73 = vld [vmem:[#allocation2 + $0xc] sm:$0xf]
    %v74 = vld [vmem:[#allocation2 + $0x10] sm:$0xf]
    %v75 = vld [vmem:[#allocation2 + $0x14] sm:$0xf]
    %v76 = vld [vmem:[#allocation2 + $0x18] sm:$0xf]
    %v77 = vld [vmem:[#allocation2 + $0x1c] sm:$0xf]
    %v78 = vld [vmem:[#allocation2 + $0x20] sm:$0xf]
    %v79 = vld [vmem:[#allocation2 + $0x24] sm:$0xf]
    %v80 = vld [vmem:[#allocation2 + $0x28] sm:$0xf]
    %v81 = vld [vmem:[#allocation2 + $0x2c] sm:$0xf]
    %v82 = vld [vmem:[#allocation2 + $0x30] sm:$0xf]
    %v83 = vld [vmem:[#allocation2 + $0x34] sm:$0xf]
    %v84 = vld [vmem:[#allocation2 + $0x38] sm:$0xf]
    %v85 = vld [vmem:[#allocation2 + $0x3c] sm:$0xf]
    %v86 = vld [vmem:[%s2] sm:$0x1]
    %v88 = vlaneseq
    %v89 = vshrl.u32 %v88, 7
    %v90 = vsub.s32 0, %v89
    %v91 = vrot.slane %v86, %v90
    %v95 = vunpack.c.l.b16 %v68
    %v96 = vunpack.c.l.b16 %v69
    %v97 = vpack.c.b16 %v96, %v95
    %v115 = vunpack.c.l.b16 %v70
    %v116 = vunpack.c.l.b16 %v71
    %v117 = vunpack.c.l.b16 %v72
    %v118 = vunpack.c.l.b16 %v73
    %v119 = vunpack.c.l.b16 %v74
    %v120 = vunpack.c.l.b16 %v75
    %v121 = vunpack.c.l.b16 %v76
    %v122 = vunpack.c.l.b16 %v77
    %v123 = vunpack.c.l.b16 %v78
    %v124 = vunpack.c.l.b16 %v79
    %v125 = vunpack.c.l.b16 %v80
    %v126 = vunpack.c.l.b16 %v81
    %v127 = vunpack.c.l.b16 %v82
    %v128 = vunpack.c.l.b16 %v83
    %v129 = vunpack.c.l.b16 %v84
    %v130 = vunpack.c.l.b16 %v85
    %v131 = vpack.c.b16 %v116, %v115
    %v132 = vpack.c.b16 %v118, %v117
    %v133 = vpack.c.b16 %v120, %v119
    %v134 = vpack.c.b16 %v122, %v121
    %v135 = vpack.c.b16 %v124, %v123
    %v136 = vpack.c.b16 %v126, %v125
    %v137 = vpack.c.b16 %v128, %v127
    %v138 = vpack.c.b16 %v130, %v129
    %147 = vmatprep.subr.bf16.mxu0 0
    %148 = vmatpush1.bf16.msra.mxu0 %v131
    %149 = vmatprep.subr.bf16.mxu0 0
    %150 = vmatpush1.bf16.msra.mxu0 %v132
    %151 = vmatprep.subr.bf16.mxu0 0
    %152 = vmatpush1.bf16.msra.mxu0 %v133
    %153 = vmatprep.subr.bf16.mxu0 0
    %154 = vmatpush1.bf16.msra.mxu0 %v134
    %155 = vmatprep.subr.bf16.mxu0 0
    %156 = vmatpush1.bf16.msra.mxu0 %v135
    %157 = vmatprep.subr.bf16.mxu0 0
    %158 = vmatpush1.bf16.msra.mxu0 %v136
    %159 = vmatprep.subr.bf16.mxu0 0
    %160 = vmatpush1.bf16.msra.mxu0 %v137
    %161 = vmatprep.subr.bf16.mxu0 0
    %162 = vmatpush1.bf16.msra.mxu0 %v138
    %163 = vmatprep.subr.bf16.mxu0 0
    %164 = vmatpush1.bf16.msra.mxu0 0
    %165 = vmatprep.subr.bf16.mxu0 0
    %166 = vmatpush1.bf16.msra.mxu0 0
    %167 = vmatprep.subr.bf16.mxu0 0
    %168 = vmatpush1.bf16.msra.mxu0 0
    %169 = vmatprep.subr.bf16.mxu0 0
    %170 = vmatpush1.bf16.msra.mxu0 0
    %171 = vmatprep.subr.bf16.mxu0 0
    %172 = vmatpush1.bf16.msra.mxu0 0
    %173 = vmatprep.subr.bf16.mxu0 0
    %174 = vmatpush1.bf16.msra.mxu0 0
    %175 = vmatprep.subr.bf16.mxu0 0
    %176 = vmatpush1.bf16.msra.mxu0 0
    %177 = vmatprep.subr.bf16.mxu0 0
    %178 = vmatpush1.bf16.msra.mxu0 0
    %179 = vmatprep.mubr.bf16.mxu0 0
    %180 = vmatmul.mubr.bf16.gmra.mrb[0].mxu0 %v97
    %v181 = vpop.f32.mrb[0].mxu0
    %v182 = vadd.f32 %v91, %v181
    %v183 = vpop.f32.mrb[0].mxu0
    %v184 = vpop.f32.mrb[0].mxu0
    %v185 = vadd.f32 %v91, %v184
    %v186 = vpop.f32.mrb[0].mxu0
    %187 = vdwg.mxu0
    %v188 = vmax.f32 %v182, 0.0
    %v189 = vmax.f32 %v185, 0.0
    %v190 = vpack.c.bf16 %v189, %v188
    %v191 = vld [vmem:[#allocation4] sm:$0xf]
    %v192 = vld [vmem:[#allocation4 + $0x4] sm:$0xf]
    %v193 = vld [vmem:[#allocation4 + $0x8] sm:$0xf]
    %v194 = vld [vmem:[#allocation4 + $0xc] sm:$0xf]
    %v195 = vld [vmem:[#allocation4 + $0x10] sm:$0xf]
    %v196 = vld [vmem:[#allocation4 + $0x14] sm:$0xf]
    %v197 = vld [vmem:[#allocation4 + $0x18] sm:$0xf]
    %v198 = vld [vmem:[#allocation4 + $0x1c] sm:$0xf]
    %v199 = vld [vmem:[#allocation4 + $0x20] sm:$0xf]
    %v200 = vld [vmem:[#allocation4 + $0x24] sm:$0xf]
    %v201 = vld [vmem:[#allocation4 + $0x28] sm:$0xf]
    %v202 = vld [vmem:[#allocation4 + $0x2c] sm:$0xf]
    %v203 = vld [vmem:[#allocation4 + $0x30] sm:$0xf]
    %v204 = vld [vmem:[#allocation4 + $0x34] sm:$0xf]
    %v205 = vld [vmem:[#allocation4 + $0x38] sm:$0xf]
    %v206 = vld [vmem:[#allocation4 + $0x3c] sm:$0xf]
    %v207 = vld [vmem:[%s4] sm:$0x1]
    %v209 = vlaneseq
    %v210 = vshrl.u32 %v209, 7
    %v211 = vsub.s32 0, %v210
    %v212 = vrot.slane %v207, %v211
    %v230 = vunpack.c.l.b16 %v191
    %v231 = vunpack.c.l.b16 %v192
    %v232 = vunpack.c.l.b16 %v193
    %v233 = vunpack.c.l.b16 %v194
    %v234 = vunpack.c.l.b16 %v195
    %v235 = vunpack.c.l.b16 %v196
    %v236 = vunpack.c.l.b16 %v197
    %v237 = vunpack.c.l.b16 %v198
    %v238 = vunpack.c.l.b16 %v199
    %v239 = vunpack.c.l.b16 %v200
    %v240 = vunpack.c.l.b16 %v201
    %v241 = vunpack.c.l.b16 %v202
    %v242 = vunpack.c.l.b16 %v203
    %v243 = vunpack.c.l.b16 %v204
    %v244 = vunpack.c.l.b16 %v205
    %v245 = vunpack.c.l.b16 %v206
    %v246 = vpack.c.b16 %v231, %v230
    %v247 = vpack.c.b16 %v233, %v232
    %v248 = vpack.c.b16 %v235, %v234
    %v249 = vpack.c.b16 %v237, %v236
    %v250 = vpack.c.b16 %v239, %v238
    %v251 = vpack.c.b16 %v241, %v240
    %v252 = vpack.c.b16 %v243, %v242
    %v253 = vpack.c.b16 %v245, %v244
    %262 = vmatprep.subr.bf16.mxu0 0
    %263 = vmatpush1.bf16.msra.mxu0 %v246
    %264 = vmatprep.subr.bf16.mxu0 0
    %265 = vmatpush1.bf16.msra.mxu0 %v247
    %266 = vmatprep.subr.bf16.mxu0 0
    %267 = vmatpush1.bf16.msra.mxu0 %v248
    %268 = vmatprep.subr.bf16.mxu0 0
    %269 = vmatpush1.bf16.msra.mxu0 %v249
    %270 = vmatprep.subr.bf16.mxu0 0
    %271 = vmatpush1.bf16.msra.mxu0 %v250
    %272 = vmatprep.subr.bf16.mxu0 0
    %273 = vmatpush1.bf16.msra.mxu0 %v251
    %274 = vmatprep.subr.bf16.mxu0 0
    %275 = vmatpush1.bf16.msra.mxu0 %v252
    %276 = vmatprep.subr.bf16.mxu0 0
    %277 = vmatpush1.bf16.msra.mxu0 %v253
    %278 = vmatprep.subr.bf16.mxu0 0
    %279 = vmatpush1.bf16.msra.mxu0 0
    %280 = vmatprep.subr.bf16.mxu0 0
    %281 = vmatpush1.bf16.msra.mxu0 0
    %282 = vmatprep.subr.bf16.mxu0 0
    %283 = vmatpush1.bf16.msra.mxu0 0
    %284 = vmatprep.subr.bf16.mxu0 0
    %285 = vmatpush1.bf16.msra.mxu0 0
    %286 = vmatprep.subr.bf16.mxu0 0
    %287 = vmatpush1.bf16.msra.mxu0 0
    %288 = vmatprep.subr.bf16.mxu0 0
    %289 = vmatpush1.bf16.msra.mxu0 0
    %290 = vmatprep.subr.bf16.mxu0 0
    %291 = vmatpush1.bf16.msra.mxu0 0
    %292 = vmatprep.subr.bf16.mxu0 0
    %293 = vmatpush1.bf16.msra.mxu0 0
    %294 = vmatprep.mubr.bf16.mxu0 0
    %295 = vmatmul.mubr.bf16.gmra.mrb[0].mxu0 %v190
    %v296 = vpop.f32.mrb[0].mxu0
    %v297 = vadd.f32 %v212, %v296
    %v298 = vpop.f32.mrb[0].mxu0
    %v299 = vpop.f32.mrb[0].mxu0
    %v300 = vadd.f32 %v212, %v299
    %v301 = vpop.f32.mrb[0].mxu0
    %302 = vdwg.mxu0
    %v303 = vpack.c.bf16 %v300, %v297
    %s304 = scalar_lea.vmem [#allocation4], 64
    %v305 = vld [vmem:[%s304] sm:$0xf]
    %v306 = vld [vmem:[%s304 + $0x4] sm:$0xf]
    %v307 = vld [vmem:[%s304 + $0x8] sm:$0xf]
    %v308 = vld [vmem:[%s304 + $0xc] sm:$0xf]
    %v309 = vld [vmem:[%s304 + $0x10] sm:$0xf]
    %v310 = vld [vmem:[%s304 + $0x14] sm:$0xf]
    %v311 = vld [vmem:[%s304 + $0x18] sm:$0xf]
    %v312 = vld [vmem:[%s304 + $0x1c] sm:$0xf]
    %v313 = vld [vmem:[%s304 + $0x20] sm:$0xf]
    %v314 = vld [vmem:[%s304 + $0x24] sm:$0xf]
    %v315 = vld [vmem:[%s304 + $0x28] sm:$0xf]
    %v316 = vld [vmem:[%s304 + $0x2c] sm:$0xf]
    %v317 = vld [vmem:[%s304 + $0x30] sm:$0xf]
    %v318 = vld [vmem:[%s304 + $0x34] sm:$0xf]
    %v319 = vld [vmem:[%s304 + $0x38] sm:$0xf]
    %v320 = vld [vmem:[%s304 + $0x3c] sm:$0xf]
    %s321 = scalar_lea.vmem %s4, 1
    %v322 = vld [vmem:[%s321] sm:$0x1]
    %v324 = vlaneseq
    %v325 = vshrl.u32 %v324, 7
    %v326 = vsub.s32 0, %v325
    %v327 = vrot.slane %v322, %v326
    %v345 = vunpack.c.l.b16 %v305
    %v346 = vunpack.c.l.b16 %v306
    %v347 = vunpack.c.l.b16 %v307
    %v348 = vunpack.c.l.b16 %v308
    %v349 = vunpack.c.l.b16 %v309
    %v350 = vunpack.c.l.b16 %v310
    %v351 = vunpack.c.l.b16 %v311
    %v352 = vunpack.c.l.b16 %v312
    %v353 = vunpack.c.l.b16 %v313
    %v354 = vunpack.c.l.b16 %v314
    %v355 = vunpack.c.l.b16 %v315
    %v356 = vunpack.c.l.b16 %v316
    %v357 = vunpack.c.l.b16 %v317
    %v358 = vunpack.c.l.b16 %v318
    %v359 = vunpack.c.l.b16 %v319
    %v360 = vunpack.c.l.b16 %v320
    %v361 = vpack.c.b16 %v346, %v345
    %v362 = vpack.c.b16 %v348, %v347
    %v363 = vpack.c.b16 %v350, %v349
    %v364 = vpack.c.b16 %v352, %v351
    %v365 = vpack.c.b16 %v354, %v353
    %v366 = vpack.c.b16 %v356, %v355
    %v367 = vpack.c.b16 %v358, %v357
    %v368 = vpack.c.b16 %v360, %v359
    %377 = vmatprep.subr.bf16.mxu0 0
    %378 = vmatpush1.bf16.msra.mxu0 %v361
    %379 = vmatprep.subr.bf16.mxu0 0
    %380 = vmatpush1.bf16.msra.mxu0 %v362
    %381 = vmatprep.subr.bf16.mxu0 0
    %382 = vmatpush1.bf16.msra.mxu0 %v363
    %383 = vmatprep.subr.bf16.mxu0 0
    %384 = vmatpush1.bf16.msra.mxu0 %v364
    %385 = vmatprep.subr.bf16.mxu0 0
    %386 = vmatpush1.bf16.msra.mxu0 %v365
    %387 = vmatprep.subr.bf16.mxu0 0
    %388 = vmatpush1.bf16.msra.mxu0 %v366
    %389 = vmatprep.subr.bf16.mxu0 0
    %390 = vmatpush1.bf16.msra.mxu0 %v367
    %391 = vmatprep.subr.bf16.mxu0 0
    %392 = vmatpush1.bf16.msra.mxu0 %v368
    %393 = vmatprep.subr.bf16.mxu0 0
    %394 = vmatpush1.bf16.msra.mxu0 0
    %395 = vmatprep.subr.bf16.mxu0 0
    %396 = vmatpush1.bf16.msra.mxu0 0
    %397 = vmatprep.subr.bf16.mxu0 0
    %398 = vmatpush1.bf16.msra.mxu0 0
    %399 = vmatprep.subr.bf16.mxu0 0
    %400 = vmatpush1.bf16.msra.mxu0 0
    %401 = vmatprep.subr.bf16.mxu0 0
    %402 = vmatpush1.bf16.msra.mxu0 0
    %403 = vmatprep.subr.bf16.mxu0 0
    %404 = vmatpush1.bf16.msra.mxu0 0
    %405 = vmatprep.subr.bf16.mxu0 0
    %406 = vmatpush1.bf16.msra.mxu0 0
    %407 = vmatprep.subr.bf16.mxu0 0
    %408 = vmatpush1.bf16.msra.mxu0 0
    %409 = vmatprep.mubr.bf16.mxu0 0
    %410 = vmatmul.mubr.bf16.gmra.mrb[0].mxu0 %v303
    %v411 = vpop.f32.mrb[0].mxu0
    %v412 = vadd.f32 %v327, %v411
    %v413 = vpop.f32.mrb[0].mxu0
    %v414 = vpop.f32.mrb[0].mxu0
    %v415 = vadd.f32 %v327, %v414
    %v416 = vpop.f32.mrb[0].mxu0
    %417 = vdwg.mxu0
    %v418 = vpack.c.bf16 %v415, %v412
    %v419 = vld [vmem:[#allocation6] sm:$0xf]
    %v420 = vld [vmem:[#allocation6 + $0x4] sm:$0xf]
    %v421 = vld [vmem:[#allocation6 + $0x8] sm:$0xf]
    %v422 = vld [vmem:[#allocation6 + $0xc] sm:$0xf]
    %v423 = vld [vmem:[#allocation6 + $0x10] sm:$0xf]
    %v424 = vld [vmem:[#allocation6 + $0x14] sm:$0xf]
    %v425 = vld [vmem:[#allocation6 + $0x18] sm:$0xf]
    %v426 = vld [vmem:[#allocation6 + $0x1c] sm:$0xf]
    %v427 = vld [vmem:[#allocation6 + $0x20] sm:$0xf]
    %v428 = vld [vmem:[#allocation6 + $0x24] sm:$0xf]
    %v429 = vld [vmem:[#allocation6 + $0x28] sm:$0xf]
    %v430 = vld [vmem:[#allocation6 + $0x2c] sm:$0xf]
    %v431 = vld [vmem:[#allocation6 + $0x30] sm:$0xf]
    %v432 = vld [vmem:[#allocation6 + $0x34] sm:$0xf]
    %v433 = vld [vmem:[#allocation6 + $0x38] sm:$0xf]
    %v434 = vld [vmem:[#allocation6 + $0x3c] sm:$0xf]
    %v435 = vld [vmem:[%s6] sm:$0x1]
    %v437 = vlaneseq
    %v438 = vshrl.u32 %v437, 7
    %v439 = vsub.s32 0, %v438
    %v440 = vrot.slane %v435, %v439
    %v458 = vunpack.c.l.b16 %v419
    %v459 = vunpack.c.l.b16 %v420
    %v460 = vunpack.c.l.b16 %v421
    %v461 = vunpack.c.l.b16 %v422
    %v462 = vunpack.c.l.b16 %v423
    %v463 = vunpack.c.l.b16 %v424
    %v464 = vunpack.c.l.b16 %v425
    %v465 = vunpack.c.l.b16 %v426
    %v466 = vunpack.c.l.b16 %v427
    %v467 = vunpack.c.l.b16 %v428
    %v468 = vunpack.c.l.b16 %v429
    %v469 = vunpack.c.l.b16 %v430
    %v470 = vunpack.c.l.b16 %v431
    %v471 = vunpack.c.l.b16 %v432
    %v472 = vunpack.c.l.b16 %v433
    %v473 = vunpack.c.l.b16 %v434
    %v474 = vpack.c.b16 %v459, %v458
    %v475 = vpack.c.b16 %v461, %v460
    %v476 = vpack.c.b16 %v463, %v462
    %v477 = vpack.c.b16 %v465, %v464
    %v478 = vpack.c.b16 %v467, %v466
    %v479 = vpack.c.b16 %v469, %v468
    %v480 = vpack.c.b16 %v471, %v470
    %v481 = vpack.c.b16 %v473, %v472
    %490 = vmatprep.subr.bf16.mxu0 0
    %491 = vmatpush1.bf16.msra.mxu0 %v474
    %492 = vmatprep.subr.bf16.mxu0 0
    %493 = vmatpush1.bf16.msra.mxu0 %v475
    %494 = vmatprep.subr.bf16.mxu0 0
    %495 = vmatpush1.bf16.msra.mxu0 %v476
    %496 = vmatprep.subr.bf16.mxu0 0
    %497 = vmatpush1.bf16.msra.mxu0 %v477
    %498 = vmatprep.subr.bf16.mxu0 0
    %499 = vmatpush1.bf16.msra.mxu0 %v478
    %500 = vmatprep.subr.bf16.mxu0 0
    %501 = vmatpush1.bf16.msra.mxu0 %v479
    %502 = vmatprep.subr.bf16.mxu0 0
    %503 = vmatpush1.bf16.msra.mxu0 %v480
    %504 = vmatprep.subr.bf16.mxu0 0
    %505 = vmatpush1.bf16.msra.mxu0 %v481
    %506 = vmatprep.subr.bf16.mxu0 0
    %507 = vmatpush1.bf16.msra.mxu0 0
    %508 = vmatprep.subr.bf16.mxu0 0
    %509 = vmatpush1.bf16.msra.mxu0 0
    %510 = vmatprep.subr.bf16.mxu0 0
    %511 = vmatpush1.bf16.msra.mxu0 0
    %512 = vmatprep.subr.bf16.mxu0 0
    %513 = vmatpush1.bf16.msra.mxu0 0
    %514 = vmatprep.subr.bf16.mxu0 0
    %515 = vmatpush1.bf16.msra.mxu0 0
    %516 = vmatprep.subr.bf16.mxu0 0
    %517 = vmatpush1.bf16.msra.mxu0 0
    %518 = vmatprep.subr.bf16.mxu0 0
    %519 = vmatpush1.bf16.msra.mxu0 0
    %520 = vmatprep.subr.bf16.mxu0 0
    %521 = vmatpush1.bf16.msra.mxu0 0
    %522 = vmatprep.mubr.bf16.mxu0 0
    %523 = vmatmul.mubr.bf16.gmra.mrb[0].mxu0 %v418
    %v524 = vpop.f32.mrb[0].mxu0
    %v525 = vadd.f32 %v440, %v524
    %v526 = vpop.f32.mrb[0].mxu0
    %v527 = vpop.f32.mrb[0].mxu0
    %v528 = vadd.f32 %v440, %v527
    %v529 = vpop.f32.mrb[0].mxu0
    %530 = vdwg.mxu0
    %v531 = vxor.u32 %v525, 2147483648
    %v532 = vxor.u32 %v528, 2147483648
    %v533 = vmul.f32 %v531, 1.442695
    %v534 = vpow.pop %v533
    %v535 = vmul.f32 %v532, 1.442695
    %v536 = vpow.pop %v535
    %v537 = vadd.f32 %v534, 1.0
    %v538 = vadd.f32 %v536, 1.0
    %v539 = vrcp.pop %v537
    %v540 = vmul.f32 1.0, %v539
    %v541 = vrcp.pop %v538
    %v542 = vmul.f32 1.0, %v541
    %543 = vst [vmem:[%s7] sm:$0xff] %v540
    %544 = vst [vmem:[%s7 + $0x8] sm:$0xff] %v542
    // Predicated region
    $region42: #{_forward_impl.1} parent=1 // pred_check
      _
    $region43: #{_forward_impl.1} parent=1 // pred_check_branch
      %546 = sbr.rel (0) target = $region45
    $region44: #{_forward_impl.1} parent=1 // pred_region
      _
    $region45: #{_forward_impl.1} parent=1 // pred_fallthru
      _
    // Predicated region
    $region46: #{_forward_impl.1} parent=1 // pred_check
      _
    $region47: #{_forward_impl.1} parent=1 // pred_check_branch
      %548 = sbr.rel (0) target = $region49
    $region48: #{_forward_impl.1} parent=1 // pred_region
      _
    $region49: #{_forward_impl.1} parent=1 // pred_fallthru
      _
    %549 = vsyncpa [#allocation3], 1
    %550 = vsyncpa [#allocation5], 1

</llo_original>
